<compile_context>
chip_gen: v5e
topology: v5e:2x2
jax: 0.10.0
libtpu: 0.0.40
codegen_flags: <defaults>
</compile_context>

<pallas_src>
import functools

import jax
import jax.numpy as jnp
from jax.experimental import pallas as pl
from jax.experimental.pallas import tpu as pltpu


def _osblock_kernel(Cp, mid,
                    x_ref, w_in_ref, b_in_ref,
                    wf1t_ref, bf1_ref, wf2_ref, bf2_ref,
                    w3_ref, o_ref):
    """One grid step == one sample (HW rows, channels-last).

    x_ref:    (HW, Cin)        activations (compute dtype, usually bf16)
    w_in_ref: (Cin, Cp + mid)  [downsample | conv1] weights, BN scales folded
    b_in_ref: (1,   Cp + mid)  [bnd_shift + bn3_shift | bn1_shift]   (f32)
    wf1t_ref: (hid, mid)       ChannelGate fc1 weight (transposed)   (f32)
    bf1_ref:  (hid, 1)         ChannelGate fc1 bias                  (f32)
    wf2_ref:  (hid, mid)       ChannelGate fc2 weight                (f32)
    bf2_ref:  (1,   mid)       ChannelGate fc2 bias                  (f32)
    w3_ref:   (mid, Cp)        conv3 weight, bn3 scale and T folded, lane-padded
    o_ref:    (HW, Cp)         lane-dense (padded) output
    """
    x = x_ref[...]                                               # (HW, Cin)

    # ---- fused conv1 + downsample: one MXU pass over x --------------------
    # TODO(synk): bn1 is IBN(mid_channels) when ibn='a'; the IBN class source
    # is not provided, so an inference-mode per-channel affine is used.
    # TODO(synk): bias-row trick (ones column in x, shift row in w_in) would
    # delete this full-slab VPU add; kept explicit for f32 shift precision.
    y = jnp.dot(x, w_in_ref[...], preferred_element_type=jnp.float32)
    y = y + b_in_ref[...]                                        # (HW, Cp+mid)

    idn = y[:, :Cp]                      # bnd(convd(x)) + bn3_shift (128-aligned slice)
    x1 = jnp.maximum(y[:, Cp:Cp + mid], 0.0)   # relu(bn1(conv1(x))), (HW, mid)

    # ---- ChannelGate (hoisted out of the T-stream loop) -------------------
    # TODO(synk): SEIBN_cnsn_BlockStream wraps SEBasicBlock_IBN_cnsn whose
    # source is not provided; each stream is treated as identity, so all T
    # gated streams are identical:  x2 = sum_t gate(stream_t(x1)) == T*(x1*g).
    # T is folded into w3 in the wrapper, so the kernel only forms x1*g.
    pooled = jnp.mean(x1, axis=0, keepdims=True)                 # per-sample GAP, (1, mid)

    # hid = mid // 16 is tiny -> VPU multiply + reductions instead of
    # degenerate 1-column MXU matmuls (all 2-D, no relayouts).
    h = jnp.sum(wf1t_ref[...] * pooled, axis=1, keepdims=True)   # (hid, 1)
    h = jnp.maximum(h + bf1_ref[...], 0.0)                       # (hid, 1)
    z = jnp.sum(wf2_ref[...] * h, axis=0, keepdims=True) + bf2_ref[...]   # (1, mid)
    g = pl.reciprocal(1.0 + jnp.exp(-z))                         # sigmoid, (1, mid)

    x2 = (x1 * g).astype(w3_ref.dtype)                           # (HW, mid)

    # ---- conv3 (+ folded bn3 scale, T) + residual + relu ------------------
    x3 = jnp.dot(x2, w3_ref[...], preferred_element_type=jnp.float32)
    o_ref[...] = jnp.maximum(x3 + idn, 0.0).astype(o_ref.dtype)  # padded lanes stay 0


def seibn_cnsn_osblock(x_nchw, params, T=3, *, compute_dtype=jnp.bfloat16):
    """Pallas wrapper. x_nchw: (N, Cin, H, W) -> (N, Cout, H, W)."""
    N, Cin, H, W = x_nchw.shape
    HW = H * W
    mid = params["w1"].shape[1]
    Cout = params["w3"].shape[1]
    Cp = ((Cout + 127) // 128) * 128          # lane-dense output width
    pad = Cp - Cout
    out_dtype = x_nchw.dtype                  # bf16 activations -> bf16 writeback

    # Row tile must stay a multiple of 8 so the (8,128) tiling / aligned slices hold.
    # TODO(synk): for HW not a multiple of 8, pad the row dimension in the wrapper.
    assert HW % 8 == 0, HW

    # NCHW -> channels-last so the 1x1 convs become matmuls.
    # TODO(synk): for production keep the model channels-last end-to-end (or use
    # allow_input_fusion) so this transpose does not add a full HBM round trip.
    x2d = jnp.transpose(x_nchw, (0, 2, 3, 1)).reshape(N * HW, Cin)

    # Fold inference-mode BN scales into the 1x1 conv weights, T into conv3,
    # and bn3_shift into the residual (downsample) shift.
    w1f = params["w1"] * params["bn1_scale"]                     # (Cin, mid)
    wdf = params["wd"] * params["bnd_scale"]                     # (Cin, Cout)
    w3f = params["w3"] * params["bn3_scale"] * float(T)          # (mid, Cout)
    res_shift = params["bnd_shift"] + params["bn3_shift"]        # (1, Cout)

    # Zero-pad only the output-channel paths (never mid) to a 128-lane width.
    if pad:
        wdf = jnp.pad(wdf, ((0, 0), (0, pad)))
        w3f = jnp.pad(w3f, ((0, 0), (0, pad)))
        res_shift = jnp.pad(res_shift, ((0, 0), (0, pad)))

    # Pack downsample + conv1 so x only goes through the MXU once; the
    # downsample block comes first so both in-kernel slices are 128-aligned.
    w_in = jnp.concatenate([wdf, w1f], axis=1)                   # (Cin, Cp+mid)
    b_in = jnp.concatenate([res_shift, params["bn1_shift"]], axis=1)

    # bf16 MXU operands (f32 accumulate); shifts and gate params stay f32.
    xq = x2d.astype(compute_dtype)
    w_in_q = w_in.astype(compute_dtype)
    w3_q = w3f.astype(compute_dtype)

    wf1t = params["wf1"].T                                       # (hid, mid)
    bf1t = params["bf1"].T                                       # (hid, 1)
    wf2 = params["wf2"]                                          # (hid, mid)
    bf2 = params["bf2"]                                          # (1, mid)

    args = (xq, w_in_q, b_in, wf1t, bf1t, wf2, bf2, w3_q)

    # Per-step VMEM working set (x tile + f32 y slab + output tile + resident
    # weights), budgeted explicitly so the same kernel fits v7x's 64 MiB VMEM
    # and raises v5e's 16 MiB scoped default.
    cbytes = jnp.dtype(compute_dtype).itemsize
    ws = (HW * Cin * cbytes
          + HW * (Cp + mid) * 4
          + HW * Cp * jnp.dtype(out_dtype).itemsize
          + (w_in_q.size + w3_q.size) * cbytes
          + 4 * (b_in.size + wf1t.size + bf1t.size + wf2.size + bf2.size))
    vmem_limit = int(min(64 * 2**20, max(32 * 2**20, 3 * ws)))

    # TODO(synk): at production HW (e.g. 56*56) that does not fit a single tile,
    # split the row axis (grid=(N, HW_tiles)) with a two-pass/accumulator GAP;
    # on v5e, if DMA stays exposed, give the x spec pipeline_mode=pl.Buffered(3).
    in_specs = [pl.BlockSpec((HW, Cin), lambda n: (n, 0))]
    in_specs += [pl.BlockSpec(a.shape, lambda n: (0, 0)) for a in args[1:]]

    out2d = pl.pallas_call(
        functools.partial(_osblock_kernel, Cp, mid),
        out_shape=jax.ShapeDtypeStruct((N * HW, Cp), out_dtype),
        grid=(N,),
        in_specs=in_specs,
        out_specs=pl.BlockSpec((HW, Cp), lambda n: (n, 0)),
        compiler_params=pltpu.CompilerParams(
            dimension_semantics=("parallel",),
            vmem_limit_bytes=vmem_limit),
    )(*args)

    # Strip lane padding (only if any), back to NCHW.
    out = out2d[:, :Cout] if pad else out2d
    out = out.reshape(N, H, W, Cout)
    return jnp.transpose(out, (0, 3, 1, 2))


def reference(x_nchw, params, T=3):
    """Module-faithful plain-JAX reference (f32, highest matmul precision)."""
    N, Cin, H, W = x_nchw.shape
    x = jnp.transpose(x_nchw, (0, 2, 3, 1)).reshape(N, H * W, Cin)

    with jax.default_matmul_precision("highest"):
        x1 = (x @ params["w1"]) * params["bn1_scale"] + params["bn1_shift"]
        x1 = jnp.maximum(x1, 0.0)

        x2 = jnp.zeros_like(x1)
        for _ in range(T):
            x2_t = x1   # TODO(synk): stream bodies (SEBasicBlock_IBN_cnsn) unavailable -> identity
            pooled = jnp.mean(x2_t, axis=1, keepdims=True)        # (N, 1, mid)
            h = jnp.maximum(pooled @ params["wf1"] + params["bf1"], 0.0)
            g = 1.0 / (1.0 + jnp.exp(-(h @ params["wf2"] + params["bf2"])))
            x2 = x2 + x2_t * g

        x3 = (x2 @ params["w3"]) * params["bn3_scale"] + params["bn3_shift"]
        idn = (x @ params["wd"]) * params["bnd_scale"] + params["bnd_shift"]
    out = jnp.maximum(x3 + idn, 0.0)
    Cout = params["w3"].shape[1]
    return jnp.transpose(out.reshape(N, H, W, Cout), (0, 3, 1, 2))


def init_params(key, Cin, Cout, reduction=4, gate_reduction=16):
    """Deterministic synthetic parameters (shapes dictated by __init__)."""
    mid = Cout // reduction                 # mid_channels
    hid = max(mid // gate_reduction, 1)     # ChannelGate hidden width
    ks = jax.random.split(key, 12)

    def nrm(k, shape, s=0.1):
        return s * jax.random.normal(k, shape, jnp.float32)

    def bn_affine(k, c, eps=1e-5):
        k1, k2, k3, k4 = jax.random.split(k, 4)
        gamma = 1.0 + nrm(k1, (c,))
        beta = nrm(k2, (c,))
        mean = nrm(k3, (c,))
        var = 1.0 + jnp.abs(nrm(k4, (c,)))
        scale = gamma / jnp.sqrt(var + eps)
        shift = beta - mean * scale
        return scale[None, :], shift[None, :]

    bn1_scale, bn1_shift = bn_affine(ks[0], mid)
    bn3_scale, bn3_shift = bn_affine(ks[1], Cout)
    bnd_scale, bnd_shift = bn_affine(ks[2], Cout)

    return dict(
        # conv1: torch weight (mid, Cin, 1, 1) -> (Cin, mid)
        w1=nrm(ks[3], (Cin, mid)),
        bn1_scale=bn1_scale, bn1_shift=bn1_shift,
        # ChannelGate fc1: (hid, mid, 1, 1) -> (mid, hid); bias (hid,)
        wf1=nrm(ks[4], (mid, hid)),
        bf1=nrm(ks[5], (1, hid)),
        # ChannelGate fc2: (mid, hid, 1, 1) -> (hid, mid); bias (mid,)
        wf2=nrm(ks[6], (hid, mid)),
        bf2=nrm(ks[7], (1, mid)),
        # conv3: (Cout, mid, 1, 1) -> (mid, Cout)
        w3=nrm(ks[8], (mid, Cout)),
        bn3_scale=bn3_scale, bn3_shift=bn3_shift,
        # downsample: (Cout, Cin, 1, 1) -> (Cin, Cout)
        wd=nrm(ks[9], (Cin, Cout)),
        bnd_scale=bnd_scale, bnd_shift=bnd_shift,
    )


if __name__ == "__main__":
    key = jax.random.PRNGKey(0)
    kx, kp = jax.random.split(key)

    # Small shapes consistent with the module:
    #   reduction=4 -> mid = Cout // 4; ChannelGate reduction=16 -> hid >= 1.
    N, Cin, Cout, H, W = 2, 32, 64, 8, 8
    T = 3

    x = jax.random.normal(kx, (N, Cin, H, W), jnp.float32)
    params = init_params(kp, Cin, Cout)

    ref = jax.block_until_ready(reference(x, params, T=T))

    # 1) f32-MXU path: tight check that the fusion/folds match the module math.
    out_f32 = jax.block_until_ready(
        seibn_cnsn_osblock(x, params, T=T, compute_dtype=jnp.float32))
    assert out_f32.shape == (N, Cout, H, W), out_f32.shape
    assert jnp.allclose(out_f32, ref, atol=1e-3, rtol=1e-3), (
        float(jnp.max(jnp.abs(out_f32 - ref))))

    # 2) default bf16-MXU path (production config): tolerance covers bf16 rounding.
    out = jax.block_until_ready(seibn_cnsn_osblock(x, params, T=T))
    assert out.shape == (N, Cout, H, W), out.shape
    assert jnp.allclose(out, ref, atol=8e-2, rtol=8e-2), (
        float(jnp.max(jnp.abs(out - ref))))

    print("KERNEL_OK")
</pallas_src>

<mosaic_0001>
module attributes {stable_mosaic.version = 11 : i64} {
  func.func @_osblock_kernel(%arg0: i32, %arg1: memref<64x32xf32, #tpu.memory_space<vmem>>, %arg2: memref<32x144xf32, #tpu.memory_space<vmem>>, %arg3: memref<1x144xf32, #tpu.memory_space<vmem>>, %arg4: memref<1x16xf32, #tpu.memory_space<vmem>>, %arg5: memref<1x1xf32, #tpu.memory_space<vmem>>, %arg6: memref<1x16xf32, #tpu.memory_space<vmem>>, %arg7: memref<1x16xf32, #tpu.memory_space<vmem>>, %arg8: memref<16x128xf32, #tpu.memory_space<vmem>>, %arg9: memref<64x128xf32, #tpu.memory_space<vmem>>) attributes {dimension_semantics = [#tpu.dimension_semantics<parallel>], iteration_bounds = array<i64: 2>, scalar_prefetch = 0 : i64, scratch_operands = 0 : i64, tpu.core_type = #tpu.core_type<tc>, window_params = [{transform_indices = @transform_0, window_bounds = array<i64: 64, 32>}, {pipeline_mode = #tpu.pipeline_mode<synchronous>, transform_indices = @transform_1, window_bounds = array<i64: 32, 144>}, {pipeline_mode = #tpu.pipeline_mode<synchronous>, transform_indices = @transform_2, window_bounds = array<i64: 1, 144>}, {pipeline_mode = #tpu.pipeline_mode<synchronous>, transform_indices = @transform_3, window_bounds = array<i64: 1, 16>}, {pipeline_mode = #tpu.pipeline_mode<synchronous>, transform_indices = @transform_4, window_bounds = array<i64: 1, 1>}, {pipeline_mode = #tpu.pipeline_mode<synchronous>, transform_indices = @transform_5, window_bounds = array<i64: 1, 16>}, {pipeline_mode = #tpu.pipeline_mode<synchronous>, transform_indices = @transform_6, window_bounds = array<i64: 1, 16>}, {pipeline_mode = #tpu.pipeline_mode<synchronous>, transform_indices = @transform_7, window_bounds = array<i64: 16, 128>}, {transform_indices = @transform_8, window_bounds = array<i64: 64, 128>}]} {
    %c0 = arith.constant 0 : index
    %c0_0 = arith.constant 0 : index
    %0 = vector.load %arg1[%c0, %c0_0] : memref<64x32xf32, #tpu.memory_space<vmem>>, vector<64x32xf32>
    %c0_1 = arith.constant 0 : index
    %c0_2 = arith.constant 0 : index
    %1 = vector.load %arg2[%c0_1, %c0_2] : memref<32x144xf32, #tpu.memory_space<vmem>>, vector<32x144xf32>
    %cst = arith.constant dense<0.000000e+00> : vector<64x144xf32>
    %2 = tpu.matmul %0, %1, %cst {dimension_numbers = #tpu.dot_dimension_numbers<[1], [0], [0], [1], [0, 0, 1, 1], [], []>} : vector<64x32xf32>, vector<32x144xf32>, vector<64x144xf32> -> vector<64x144xf32>
    %c0_3 = arith.constant 0 : index
    %c0_4 = arith.constant 0 : index
    %3 = vector.load %arg3[%c0_3, %c0_4] : memref<1x144xf32, #tpu.memory_space<vmem>>, vector<1x144xf32>
    %4 = vector.broadcast %3 : vector<1x144xf32> to vector<64x144xf32>
    %5 = arith.addf %2, %4 : vector<64x144xf32>
    %6 = vector.extract_strided_slice %5 {offsets = [0, 0], sizes = [64, 128], strides = [1, 1]} : vector<64x144xf32> to vector<64x128xf32>
    %7 = vector.extract_strided_slice %5 {offsets = [0, 128], sizes = [64, 16], strides = [1, 1]} : vector<64x144xf32> to vector<64x16xf32>
    %cst_5 = arith.constant 0.000000e+00 : f32
    %8 = vector.broadcast %cst_5 : f32 to vector<64x16xf32>
    %9 = arith.maximumf %7, %8 : vector<64x16xf32>
    %cst_6 = arith.constant dense<0.000000e+00> : vector<16xf32>
    %10 = vector.multi_reduction <add>, %9, %cst_6 [0] : vector<64x16xf32> to vector<16xf32>
    %11 = vector.shape_cast %10 : vector<16xf32> to vector<1x16xf32>
    %cst_7 = arith.constant 6.400000e+01 : f32
    %12 = vector.broadcast %cst_7 : f32 to vector<1x16xf32>
    %13 = arith.divf %11, %12 : vector<1x16xf32>
    %c0_8 = arith.constant 0 : index
    %c0_9 = arith.constant 0 : index
    %14 = vector.load %arg4[%c0_8, %c0_9] : memref<1x16xf32, #tpu.memory_space<vmem>>, vector<1x16xf32>
    %15 = arith.mulf %14, %13 : vector<1x16xf32>
    %cst_10 = arith.constant dense<0.000000e+00> : vector<1xf32>
    %16 = vector.multi_reduction <add>, %15, %cst_10 [1] : vector<1x16xf32> to vector<1xf32>
    %17 = vector.shape_cast %16 : vector<1xf32> to vector<1x1xf32>
    %c0_11 = arith.constant 0 : index
    %c0_12 = arith.constant 0 : index
    %18 = vector.load %arg5[%c0_11, %c0_12] : memref<1x1xf32, #tpu.memory_space<vmem>>, vector<1x1xf32>
    %19 = arith.addf %17, %18 : vector<1x1xf32>
    %cst_13 = arith.constant 0.000000e+00 : f32
    %20 = vector.broadcast %cst_13 : f32 to vector<1x1xf32>
    %21 = arith.maximumf %19, %20 : vector<1x1xf32>
    %c0_14 = arith.constant 0 : index
    %c0_15 = arith.constant 0 : index
    %22 = vector.load %arg6[%c0_14, %c0_15] : memref<1x16xf32, #tpu.memory_space<vmem>>, vector<1x16xf32>
    %23 = vector.broadcast %21 : vector<1x1xf32> to vector<1x16xf32>
    %24 = arith.mulf %22, %23 : vector<1x16xf32>
    %cst_16 = arith.constant dense<0.000000e+00> : vector<16xf32>
    %25 = vector.multi_reduction <add>, %24, %cst_16 [0] : vector<1x16xf32> to vector<16xf32>
    %26 = vector.shape_cast %25 : vector<16xf32> to vector<1x16xf32>
    %c0_17 = arith.constant 0 : index
    %c0_18 = arith.constant 0 : index
    %27 = vector.load %arg7[%c0_17, %c0_18] : memref<1x16xf32, #tpu.memory_space<vmem>>, vector<1x16xf32>
    %28 = arith.addf %26, %27 : vector<1x16xf32>
    %cst_19 = arith.constant 0.000000e+00 : f32
    %29 = vector.broadcast %cst_19 : f32 to vector<1x16xf32>
    %30 = arith.subf %29, %28 : vector<1x16xf32>
    %31 = math.exp %30 : vector<1x16xf32>
    %cst_20 = arith.constant 1.000000e+00 : f32
    %32 = vector.broadcast %cst_20 : f32 to vector<1x16xf32>
    %33 = arith.addf %32, %31 : vector<1x16xf32>
    %34 = tpu.reciprocal %33 : vector<1x16xf32> -> vector<1x16xf32>
    %35 = vector.broadcast %34 : vector<1x16xf32> to vector<64x16xf32>
    %36 = arith.mulf %9, %35 : vector<64x16xf32>
    %c0_21 = arith.constant 0 : index
    %c0_22 = arith.constant 0 : index
    %37 = vector.load %arg8[%c0_21, %c0_22] : memref<16x128xf32, #tpu.memory_space<vmem>>, vector<16x128xf32>
    %cst_23 = arith.constant dense<0.000000e+00> : vector<64x128xf32>
    %38 = tpu.matmul %36, %37, %cst_23 {dimension_numbers = #tpu.dot_dimension_numbers<[1], [0], [0], [1], [0, 0, 1, 1], [], []>} : vector<64x16xf32>, vector<16x128xf32>, vector<64x128xf32> -> vector<64x128xf32>
    %39 = arith.addf %38, %6 : vector<64x128xf32>
    %cst_24 = arith.constant 0.000000e+00 : f32
    %40 = vector.broadcast %cst_24 : f32 to vector<64x128xf32>
    %41 = arith.maximumf %39, %40 : vector<64x128xf32>
    %c0_25 = arith.constant 0 : index
    %c0_26 = arith.constant 0 : index
    %42 = vector.load %arg9[%c0_25, %c0_26] : memref<64x128xf32, #tpu.memory_space<vmem>>, vector<64x128xf32>
    tpu.vector_store %arg9[%c0_25, %c0_26], %41 {strides = array<i32>} : memref<64x128xf32, #tpu.memory_space<vmem>>, vector<64x128xf32>,
    return
  }
  func.func @transform_0(%arg0: i32) -> (i32, i32) {
    %c0_i32 = arith.constant 0 : i32
    %c0_i32_0 = arith.constant 0 : i32
    return %arg0, %c0_i32 : i32, i32
  }
  func.func @transform_1(%arg0: i32) -> (i32, i32) {
    %c0_i32 = arith.constant 0 : i32
    %c0_i32_0 = arith.constant 0 : i32
    %c0_i32_1 = arith.constant 0 : i32
    return %c0_i32, %c0_i32_0 : i32, i32
  }
  func.func @transform_2(%arg0: i32) -> (i32, i32) {
    %c0_i32 = arith.constant 0 : i32
    %c0_i32_0 = arith.constant 0 : i32
    %c0_i32_1 = arith.constant 0 : i32
    return %c0_i32, %c0_i32_0 : i32, i32
  }
  func.func @transform_3(%arg0: i32) -> (i32, i32) {
    %c0_i32 = arith.constant 0 : i32
    %c0_i32_0 = arith.constant 0 : i32
    %c0_i32_1 = arith.constant 0 : i32
    return %c0_i32, %c0_i32_0 : i32, i32
  }
  func.func @transform_4(%arg0: i32) -> (i32, i32) {
    %c0_i32 = arith.constant 0 : i32
    %c0_i32_0 = arith.constant 0 : i32
    %c0_i32_1 = arith.constant 0 : i32
    return %c0_i32, %c0_i32_0 : i32, i32
  }
  func.func @transform_5(%arg0: i32) -> (i32, i32) {
    %c0_i32 = arith.constant 0 : i32
    %c0_i32_0 = arith.constant 0 : i32
    %c0_i32_1 = arith.constant 0 : i32
    return %c0_i32, %c0_i32_0 : i32, i32
  }
  func.func @transform_6(%arg0: i32) -> (i32, i32) {
    %c0_i32 = arith.constant 0 : i32
    %c0_i32_0 = arith.constant 0 : i32
    %c0_i32_1 = arith.constant 0 : i32
    return %c0_i32, %c0_i32_0 : i32, i32
  }
  func.func @transform_7(%arg0: i32) -> (i32, i32) {
    %c0_i32 = arith.constant 0 : i32
    %c0_i32_0 = arith.constant 0 : i32
    %c0_i32_1 = arith.constant 0 : i32
    return %c0_i32, %c0_i32_0 : i32, i32
  }
  func.func @transform_8(%arg0: i32) -> (i32, i32) {
    %c0_i32 = arith.constant 0 : i32
    %c0_i32_0 = arith.constant 0 : i32
    return %arg0, %c0_i32 : i32, i32
  }
}

</mosaic_0001>

<llo_original>
// kernel: tpu_custom_call.1
$region0: #{tpu_custom_call.1}
  #allocation0 [shape = 'u32[]', space=smem, size = 0x4, offset = 0x4, fixed_abs, tag = 'smem constant byte address 0x4 - core index']
  #allocation1 [shape = 'u32[72,128]{1,0:T(1,128)}', space=vmem, size = 0x9000, scoped, tag = 'internal scratch']
  #allocation2 [shape = 'f32[1,1]{1,0:T(1,128)S(1)}', space=vmem, size = 0x200, scoped, tag = 'scoped memory for tpu_custom_call.1']
  %s0 = inlined_call_operand.vmem [shape: f32[128,32], index: 0, kind: input, shape index: {}]
  %s1 = inlined_call_operand.vmem [shape: f32[32,144], index: 1, kind: input, shape index: {}]
  %s2 = inlined_call_operand.vmem [shape: f32[1,144], index: 2, kind: input, shape index: {}]
  %s3 = inlined_call_operand.vmem [shape: f32[1,16], index: 3, kind: input, shape index: {}]
  %s4 = inlined_call_operand.<no memory space> [shape: f32[1,1], index: 4, kind: input, shape index: {}]
  %s5 = inlined_call_operand.vmem [shape: f32[1,16], index: 5, kind: input, shape index: {}]
  %s6 = inlined_call_operand.vmem [shape: f32[1,16], index: 6, kind: input, shape index: {}]
  %s7 = inlined_call_operand.vmem [shape: f32[16,128], index: 7, kind: input, shape index: {}]
  %s8 = inlined_call_operand.hbm [shape: f32[128,128], index: 8, kind: output, shape index: {}]
  %s9 = sld [smem:[#allocation0]]
  $region65: #{tpu_custom_call.1} parent=0
    _
  %s11 = ssub.s32 1, %s9
  %s12 = scalar_select 0, %s11, %s9
  %v13 = vstv %s4
  %14 = vst [vmem:[#allocation2] sm:$0x1] %v13
  $region1: #{tpu_custom_call.1} parent=0
    #allocation3 [shape = 'u8[65536]{0}', space=vmem, size = 0x10000, scoped, tag = 'output window, operand 0']
    #allocation4 [shape = 's32[2]{0}', space=sflag, size = 0x8, scoped, tag = 'scoped memory for tpu_custom_call.1']
    %15 = vsyncpa [#allocation4], 0
    %s16 = scalar_lea.sflag [#allocation4], 1
    %17 = vsyncpa %s16, 0
    loop: start=0, step=1, limit=4
    $region2: #{tpu_custom_call.1} parent=1 // loop_pre_header
      _
    $region3: #{tpu_custom_call.1} parent=1 // loop_header
      %s19 = sphi 0, %s23
      %p20 = scmp.ge.s32.totalorder %s19, 4
      %s29 = sphi 0, %s31
      %s32 = sphi 0, %s29
      %s33 = sphi 0, %s32
      %s49 = sphi 0, %s33
      %s53 = sphi 0, %s53
      %s55 = sphi 0, %s53
      %s56 = sphi 0, %s55
      %s70 = sphi 0, %s56
      %s74 = sphi 0, %s74
      %s76 = sphi 0, %s74
      %s77 = sphi 0, %s76
      %s91 = sphi 0, %s77
      %s95 = sphi 0, %s95
      %s97 = sphi 0, %s95
      %s98 = sphi 0, %s97
      %s112 = sphi 0, %s98
      %s116 = sphi 0, %s116
      %s118 = sphi 0, %s116
      %s119 = sphi 0, %s118
      %s133 = sphi 0, %s119
      %s137 = sphi 0, %s137
      %s139 = sphi 0, %s137
      %s140 = sphi 0, %s139
      %s154 = sphi 0, %s140
      %s158 = sphi 0, %s158
      %s160 = sphi 0, %s158
      %s161 = sphi 0, %s160
      %s175 = sphi 0, %s161
      %s179 = sphi 0, %s179
      %s181 = sphi 0, %s179
      %s182 = sphi 0, %s181
      %s196 = sphi 0, %s182
      %s202 = sphi 0, %s204
      %s205 = sphi 0, %s202
      %s206 = sphi 0, %s205
      %s222 = sphi 0, %s206
    $region4: #{tpu_custom_call.1} parent=1 // loop_header_branch
      %22 = sbr.rel (%p20) target = $region8
    $region5: #{tpu_custom_call.1} parent=1 // loop_body
      %s24 = ssub.s32 %s19, 1
      %s25 = ssub.s32 %s19, 2
      %s26 = sadd.s32 %s19, 1
      %s27 = ssub.s32 %s19, %s26
      %p28 = scmp.eq.s32.totalorder %s27, 0
      %s30 = sadd.s32 %s29, 1
      %s31 = scalar_select %p28, %s29, %s30
      %p34 = pneg %p28
      %p35 = scmp.eq.s32.totalorder %s19, 1
      %p36 = por %p34, %p35
      %p37 = scmp.ne.s32.totalorder %s29, %s32
      %p38 = scmp.eq.s32.totalorder %s19, 0
      %p39 = por %p37, %p38
      %p40 = scmp.ne.s32.totalorder %s29, %s32
      %p41 = scmp.eq.s32.totalorder %s24, 1
      %p42 = por %p40, %p41
      %p43 = scmp.ne.s32.totalorder %s32, %s33
      %p44 = scmp.eq.s32.totalorder %s24, 0
      %p45 = por %p43, %p44
      %p46 = scmp.ne.s32.totalorder %s32, %s33
      %p47 = scmp.eq.s32.totalorder %s25, 1
      %p48 = por %p46, %p47
      %p50 = scmp.ne.s32.totalorder %s33, %s49
      %p51 = scmp.eq.s32.totalorder %s25, 0
      %p52 = por %p50, %p51
      %s54 = sadd.s32 %s53, 1
      %p57 = scmp.eq.s32.totalorder %s19, 1
      %p58 = scmp.ne.s32.totalorder %s53, %s55
      %p59 = scmp.eq.s32.totalorder %s19, 0
      %p60 = por %p58, %p59
      %p61 = scmp.ne.s32.totalorder %s53, %s55
      %p62 = scmp.eq.s32.totalorder %s24, 1
      %p63 = por %p61, %p62
      %p64 = scmp.ne.s32.totalorder %s55, %s56
      %p65 = scmp.eq.s32.totalorder %s24, 0
      %p66 = por %p64, %p65
      %p67 = scmp.ne.s32.totalorder %s55, %s56
      %p68 = scmp.eq.s32.totalorder %s25, 1
      %p69 = por %p67, %p68
      %p71 = scmp.ne.s32.totalorder %s56, %s70
      %p72 = scmp.eq.s32.totalorder %s25, 0
      %p73 = por %p71, %p72
      %s75 = sadd.s32 %s74, 1
      %p78 = scmp.eq.s32.totalorder %s19, 1
      %p79 = scmp.ne.s32.totalorder %s74, %s76
      %p80 = scmp.eq.s32.totalorder %s19, 0
      %p81 = por %p79, %p80
      %p82 = scmp.ne.s32.totalorder %s74, %s76
      %p83 = scmp.eq.s32.totalorder %s24, 1
      %p84 = por %p82, %p83
      %p85 = scmp.ne.s32.totalorder %s76, %s77
      %p86 = scmp.eq.s32.totalorder %s24, 0
      %p87 = por %p85, %p86
      %p88 = scmp.ne.s32.totalorder %s76, %s77
      %p89 = scmp.eq.s32.totalorder %s25, 1
      %p90 = por %p88, %p89
      %p92 = scmp.ne.s32.totalorder %s77, %s91
      %p93 = scmp.eq.s32.totalorder %s25, 0
      %p94 = por %p92, %p93
      %s96 = sadd.s32 %s95, 1
      %p99 = scmp.eq.s32.totalorder %s19, 1
      %p100 = scmp.ne.s32.totalorder %s95, %s97
      %p101 = scmp.eq.s32.totalorder %s19, 0
      %p102 = por %p100, %p101
      %p103 = scmp.ne.s32.totalorder %s95, %s97
      %p104 = scmp.eq.s32.totalorder %s24, 1
      %p105 = por %p103, %p104
      %p106 = scmp.ne.s32.totalorder %s97, %s98
      %p107 = scmp.eq.s32.totalorder %s24, 0
      %p108 = por %p106, %p107
      %p109 = scmp.ne.s32.totalorder %s97, %s98
      %p110 = scmp.eq.s32.totalorder %s25, 1
      %p111 = por %p109, %p110
      %p113 = scmp.ne.s32.totalorder %s98, %s112
      %p114 = scmp.eq.s32.totalorder %s25, 0
      %p115 = por %p113, %p114
      %s117 = sadd.s32 %s116, 1
      %p120 = scmp.eq.s32.totalorder %s19, 1
      %p121 = scmp.ne.s32.totalorder %s116, %s118
      %p122 = scmp.eq.s32.totalorder %s19, 0
      %p123 = por %p121, %p122
      %p124 = scmp.ne.s32.totalorder %s116, %s118
      %p125 = scmp.eq.s32.totalorder %s24, 1
      %p126 = por %p124, %p125
      %p127 = scmp.ne.s32.totalorder %s118, %s119
      %p128 = scmp.eq.s32.totalorder %s24, 0
      %p129 = por %p127, %p128
      %p130 = scmp.ne.s32.totalorder %s118, %s119
      %p131 = scmp.eq.s32.totalorder %s25, 1
      %p132 = por %p130, %p131
      %p134 = scmp.ne.s32.totalorder %s119, %s133
      %p135 = scmp.eq.s32.totalorder %s25, 0
      %p136 = por %p134, %p135
      %s138 = sadd.s32 %s137, 1
      %p141 = scmp.eq.s32.totalorder %s19, 1
      %p142 = scmp.ne.s32.totalorder %s137, %s139
      %p143 = scmp.eq.s32.totalorder %s19, 0
      %p144 = por %p142, %p143
      %p145 = scmp.ne.s32.totalorder %s137, %s139
      %p146 = scmp.eq.s32.totalorder %s24, 1
      %p147 = por %p145, %p146
      %p148 = scmp.ne.s32.totalorder %s139, %s140
      %p149 = scmp.eq.s32.totalorder %s24, 0
      %p150 = por %p148, %p149
      %p151 = scmp.ne.s32.totalorder %s139, %s140
      %p152 = scmp.eq.s32.totalorder %s25, 1
      %p153 = por %p151, %p152
      %p155 = scmp.ne.s32.totalorder %s140, %s154
      %p156 = scmp.eq.s32.totalorder %s25, 0
      %p157 = por %p155, %p156
      %s159 = sadd.s32 %s158, 1
      %p162 = scmp.eq.s32.totalorder %s19, 1
      %p163 = scmp.ne.s32.totalorder %s158, %s160
      %p164 = scmp.eq.s32.totalorder %s19, 0
      %p165 = por %p163, %p164
      %p166 = scmp.ne.s32.totalorder %s158, %s160
      %p167 = scmp.eq.s32.totalorder %s24, 1
      %p168 = por %p166, %p167
      %p169 = scmp.ne.s32.totalorder %s160, %s161
      %p170 = scmp.eq.s32.totalorder %s24, 0
      %p171 = por %p169, %p170
      %p172 = scmp.ne.s32.totalorder %s160, %s161
      %p173 = scmp.eq.s32.totalorder %s25, 1
      %p174 = por %p172, %p173
      %p176 = scmp.ne.s32.totalorder %s161, %s175
      %p177 = scmp.eq.s32.totalorder %s25, 0
      %p178 = por %p176, %p177
      %s180 = sadd.s32 %s179, 1
      %p183 = scmp.eq.s32.totalorder %s19, 1
      %p184 = scmp.ne.s32.totalorder %s179, %s181
      %p185 = scmp.eq.s32.totalorder %s19, 0
      %p186 = por %p184, %p185
      %p187 = scmp.ne.s32.totalorder %s179, %s181
      %p188 = scmp.eq.s32.totalorder %s24, 1
      %p189 = por %p187, %p188
      %p190 = scmp.ne.s32.totalorder %s181, %s182
      %p191 = scmp.eq.s32.totalorder %s24, 0
      %p192 = por %p190, %p191
      %p193 = scmp.ne.s32.totalorder %s181, %s182
      %p194 = scmp.eq.s32.totalorder %s25, 1
      %p195 = por %p193, %p194
      %p197 = scmp.ne.s32.totalorder %s182, %s196
      %p198 = scmp.eq.s32.totalorder %s25, 0
      %p199 = por %p197, %p198
      %s200 = ssub.s32 %s19, %s26
      %p201 = scmp.eq.s32.totalorder %s200, 0
      %s203 = sadd.s32 %s202, 1
      %s204 = scalar_select %p201, %s202, %s203
      %p207 = pneg %p201
      %p208 = scmp.eq.s32.totalorder %s19, 1
      %p209 = por %p207, %p208
      %p210 = scmp.ne.s32.totalorder %s202, %s205
      %p211 = scmp.eq.s32.totalorder %s19, 0
      %p212 = por %p210, %p211
      %p213 = scmp.ne.s32.totalorder %s202, %s205
      %p214 = scmp.eq.s32.totalorder %s24, 1
      %p215 = por %p213, %p214
      %p216 = scmp.ne.s32.totalorder %s205, %s206
      %p217 = scmp.eq.s32.totalorder %s24, 0
      %p218 = por %p216, %p217
      %p219 = scmp.ne.s32.totalorder %s205, %s206
      %p220 = scmp.eq.s32.totalorder %s25, 1
      %p221 = por %p219, %p220
      %p223 = scmp.ne.s32.totalorder %s206, %s222
      %p224 = scmp.eq.s32.totalorder %s25, 0
      %p225 = por %p223, %p224
      %p226 = scmp.le.s32.totalorder 1, %s19
      %p227 = scmp.lt.s32.totalorder %s19, 3
      %p228 = pnand %p226, %p227
      %p229 = pneg %p228
      // Predicated region
      $region9: #{tpu_custom_call.1} parent=5 // pred_check
        _
      $region10: #{tpu_custom_call.1} parent=5 // pred_check_branch
        %231 = sbr.rel (%p228) target = $region12
      $region11: #{tpu_custom_call.1} parent=5 // pred_region
        %s232 = ssub.s32 %s19, 1
        // Predicated region
        $region13: #{tpu_custom_call.1} parent=11 // pred_check
          %p233 = pneg %p66
        $region14: #{tpu_custom_call.1} parent=11 // pred_check_branch
          %235 = sbr.rel (%p233) target = $region16
        $region15: #{tpu_custom_call.1} parent=11 // pred_region
          _
        $region16: #{tpu_custom_call.1} parent=11 // pred_fallthru
          _
        // Predicated region
        $region17: #{tpu_custom_call.1} parent=11 // pred_check
          %p236 = pneg %p87
        $region18: #{tpu_custom_call.1} parent=11 // pred_check_branch
          %238 = sbr.rel (%p236) target = $region20
        $region19: #{tpu_custom_call.1} parent=11 // pred_region
          _
        $region20: #{tpu_custom_call.1} parent=11 // pred_fallthru
          _
        // Predicated region
        $region21: #{tpu_custom_call.1} parent=11 // pred_check
          %p239 = pneg %p108
        $region22: #{tpu_custom_call.1} parent=11 // pred_check_branch
          %241 = sbr.rel (%p239) target = $region24
        $region23: #{tpu_custom_call.1} parent=11 // pred_region
          _
        $region24: #{tpu_custom_call.1} parent=11 // pred_fallthru
          _
        // Predicated region
        $region25: #{tpu_custom_call.1} parent=11 // pred_check
          %p242 = pneg %p129
        $region26: #{tpu_custom_call.1} parent=11 // pred_check_branch
          %244 = sbr.rel (%p242) target = $region28
        $region27: #{tpu_custom_call.1} parent=11 // pred_region
          _
        $region28: #{tpu_custom_call.1} parent=11 // pred_fallthru
          _
        // Predicated region
        $region29: #{tpu_custom_call.1} parent=11 // pred_check
          %p245 = pneg %p150
        $region30: #{tpu_custom_call.1} parent=11 // pred_check_branch
          %247 = sbr.rel (%p245) target = $region32
        $region31: #{tpu_custom_call.1} parent=11 // pred_region
          _
        $region32: #{tpu_custom_call.1} parent=11 // pred_fallthru
          _
        // Predicated region
        $region33: #{tpu_custom_call.1} parent=11 // pred_check
          %p248 = pneg %p171
        $region34: #{tpu_custom_call.1} parent=11 // pred_check_branch
          %250 = sbr.rel (%p248) target = $region36
        $region35: #{tpu_custom_call.1} parent=11 // pred_region
          _
        $region36: #{tpu_custom_call.1} parent=11 // pred_fallthru
          _
        // Predicated region
        $region37: #{tpu_custom_call.1} parent=11 // pred_check
          %p251 = pneg %p192
        $region38: #{tpu_custom_call.1} parent=11 // pred_check_branch
          %253 = sbr.rel (%p251) target = $region40
        $region39: #{tpu_custom_call.1} parent=11 // pred_region
          _
        $region40: #{tpu_custom_call.1} parent=11 // pred_fallthru
          _
      $region12: #{tpu_custom_call.1} parent=5 // pred_fallthru
        _
      %p254 = scmp.lt.s32.totalorder %s19, 2
      // Predicated region
      $region41: #{tpu_custom_call.1} parent=5 // pred_check
        %p255 = pneg %p254
      $region42: #{tpu_custom_call.1} parent=5 // pred_check_branch
        %257 = sbr.rel (%p255) target = $region44
      $region43: #{tpu_custom_call.1} parent=5 // pred_region
        // Predicated region
        $region45: #{tpu_custom_call.1} parent=43 // pred_check
          %p258 = pneg %p39
        $region46: #{tpu_custom_call.1} parent=43 // pred_check_branch
          %260 = sbr.rel (%p258) target = $region48
        $region47: #{tpu_custom_call.1} parent=43 // pred_region
          %s261 = smul.u32 8, %s19
          %p262 = scmp.lt.s32.totalorder %s261, 15
          %s263 = scalar_select %p262, %s261, 15
          %s264 = smul.addr %s263, 8
          %s265 = scalar_lea.vmem %s0, %s264
          %s266 = smul.u32 8, %s19
        $region48: #{tpu_custom_call.1} parent=43 // pred_fallthru
          _
      $region44: #{tpu_custom_call.1} parent=5 // pred_fallthru
        _
      %p267 = scmp.le.s32.totalorder 1, %s19
      %p268 = scmp.lt.s32.totalorder %s19, 3
      %p269 = pnand %p267, %p268
      %p270 = pneg %p269
      // Predicated region
      $region49: #{tpu_custom_call.1} parent=5 // pred_check
        _
      $region50: #{tpu_custom_call.1} parent=5 // pred_check_branch
        %272 = sbr.rel (%p269) target = $region52
      $region51: #{tpu_custom_call.1} parent=5 // pred_region
        %s273 = ssub.s32 %s19, 1
        %s274 = smul.u32 8, %s24
        %p275 = scmp.lt.s32.totalorder %s274, 15
        %s276 = scalar_select %p275, %s274, 15
        %s277 = smul.addr %s276, 8
        %s278 = scalar_lea.vmem %s0, %s277
        %p279 = pneg %p45
        %p280 = pneg %p42
        %p281 = pneg %p66
        %p282 = pneg %p63
        %p283 = pneg %p87
        %p284 = pneg %p84
        %p285 = pneg %p108
        %p286 = pneg %p105
        %p287 = pneg %p129
        %p288 = pneg %p126
        %p289 = pneg %p150
        %p290 = pneg %p147
        %p291 = pneg %p171
        %p292 = pneg %p168
        %p293 = pneg %p192
        %p294 = pneg %p189
        %p295 = pneg %p218
        %p296 = pneg %p215
        %s297 = sand.u32 %s205, 1
        %s298 = scalar_lea.sflag [#allocation4], %s297
        %s299 = sand.u32 %s205, 1
        %s300 = smul.addr %s299, 64
        %s301 = scalar_lea.vmem [#allocation3], %s300
        %s302 = smul.u32 8, %s24
        %p303 = scmp.lt.s32.totalorder %s302, 15
        %s304 = scalar_select %p303, %s302, 15
        %s305 = smul.addr %s304, 8
        %s306 = scalar_lea.vmem %s0, %s305
        %s307 = smul.u32 8, %s24
        %s308 = smul.u32 8, %s24
        %v309 = vld [vmem:[%s306] sm:$0xff]
        %v310 = vld [vmem:[%s306 + $0x8] sm:$0xff]
        %v311 = vld [vmem:[%s306 + $0x10] sm:$0xff]
        %v312 = vld [vmem:[%s306 + $0x18] sm:$0xff]
        %v313 = vld [vmem:[%s306 + $0x20] sm:$0xff]
        %v314 = vld [vmem:[%s306 + $0x28] sm:$0xff]
        %v315 = vld [vmem:[%s306 + $0x30] sm:$0xff]
        %v316 = vld [vmem:[%s306 + $0x38] sm:$0xff]
        %v317 = vld [vmem:[%s1] sm:$0xff]
        %v318 = vld [vmem:[%s1 + $0x8] sm:$0xff]
        %v319 = vld [vmem:[%s1 + $0x10] sm:$0xff]
        %v320 = vld [vmem:[%s1 + $0x18] sm:$0xff]
        %v321 = vld [vmem:[%s1 + $0x20] sm:$0xff]
        %v322 = vld [vmem:[%s1 + $0x28] sm:$0xff]
        %v323 = vld [vmem:[%s1 + $0x30] sm:$0xff]
        %v324 = vld [vmem:[%s1 + $0x38] sm:$0xff]
        %v325 = vld [vmem:[%s2] sm:$0x3]
        %v327 = vperm.slane %v325, 0
        %v328 = vperm.slane %v325, 1
        %vm331 = vcmask 261120
        %v333 = vsel %vm331, %v309, 0
        %v336 = vsel %vm331, %v310, 0
        %v339 = vsel %vm331, %v311, 0
        %v342 = vsel %vm331, %v312, 0
        %v345 = vsel %vm331, %v313, 0
        %v348 = vsel %vm331, %v314, 0
        %v351 = vsel %vm331, %v315, 0
        %v354 = vsel %vm331, %v316, 0
        %356 = vmatpush.msra.mxu0 0.0
        %357 = vmatpush.msra.mxu0 0.0
        %358 = vmatpush.msra.mxu0 0.0
        %359 = vmatpush.msra.mxu0 0.0
        %360 = vmatpush.msra.mxu0 0.0
        %361 = vmatpush.msra.mxu0 0.0
        %362 = vmatpush.msra.mxu0 0.0
        %363 = vmatpush.msra.mxu0 0.0
        %364 = vmatpush.msra.mxu0 0.0
        %365 = vmatpush.msra.mxu0 0.0
        %366 = vmatpush.msra.mxu0 0.0
        %367 = vmatpush.msra.mxu0 0.0
        %368 = vmatpush.msra.mxu0 %v323
        %369 = vmatpush.msra.mxu0 %v321
        %370 = vmatpush.msra.mxu0 %v319
        %371 = vmatpush.msra.mxu0 %v317
        %372 = vmatmul.f32.gmra.mxu0 %v333
        %v373 = vpop.f32.mrf.mxu0
        %v374 = vadd.f32 %v327, %v373
        %375 = vmatmul.f32.gmra.mxu0 %v336
        %v376 = vpop.f32.mrf.mxu0
        %v377 = vadd.f32 %v327, %v376
        %378 = vmatmul.f32.gmra.mxu0 %v339
        %v379 = vpop.f32.mrf.mxu0
        %v380 = vadd.f32 %v327, %v379
        %381 = vmatmul.f32.gmra.mxu0 %v342
        %v382 = vpop.f32.mrf.mxu0
        %v383 = vadd.f32 %v327, %v382
        %384 = vmatmul.f32.gmra.mxu0 %v345
        %v385 = vpop.f32.mrf.mxu0
        %v386 = vadd.f32 %v327, %v385
        %387 = vmatmul.f32.gmra.mxu0 %v348
        %v388 = vpop.f32.mrf.mxu0
        %v389 = vadd.f32 %v327, %v388
        %390 = vmatmul.f32.gmra.mxu0 %v351
        %v391 = vpop.f32.mrf.mxu0
        %v392 = vadd.f32 %v327, %v391
        %393 = vmatmul.f32.gmra.mxu0 %v354
        %v394 = vpop.f32.mrf.mxu0
        %v395 = vadd.f32 %v327, %v394
        %396 = vdwg.mxu0
        %397 = vmatpush.msra.mxu0 0.0
        %398 = vmatpush.msra.mxu0 0.0
        %399 = vmatpush.msra.mxu0 0.0
        %400 = vmatpush.msra.mxu0 0.0
        %401 = vmatpush.msra.mxu0 0.0
        %402 = vmatpush.msra.mxu0 0.0
        %403 = vmatpush.msra.mxu0 0.0
        %404 = vmatpush.msra.mxu0 0.0
        %405 = vmatpush.msra.mxu0 0.0
        %406 = vmatpush.msra.mxu0 0.0
        %407 = vmatpush.msra.mxu0 0.0
        %408 = vmatpush.msra.mxu0 0.0
        %409 = vmatpush.msra.mxu0 %v324
        %410 = vmatpush.msra.mxu0 %v322
        %411 = vmatpush.msra.mxu0 %v320
        %412 = vmatpush.msra.mxu0 %v318
        %413 = vmatmul.f32.gmra.mxu0 %v333
        %v414 = vpop.f32.mrf.mxu0
        %v415 = vadd.f32 %v328, %v414
        %416 = vmatmul.f32.gmra.mxu0 %v336
        %v417 = vpop.f32.mrf.mxu0
        %v418 = vadd.f32 %v328, %v417
        %419 = vmatmul.f32.gmra.mxu0 %v339
        %v420 = vpop.f32.mrf.mxu0
        %v421 = vadd.f32 %v328, %v420
        %422 = vmatmul.f32.gmra.mxu0 %v342
        %v423 = vpop.f32.mrf.mxu0
        %v424 = vadd.f32 %v328, %v423
        %425 = vmatmul.f32.gmra.mxu0 %v345
        %v426 = vpop.f32.mrf.mxu0
        %v427 = vadd.f32 %v328, %v426
        %428 = vmatmul.f32.gmra.mxu0 %v348
        %v429 = vpop.f32.mrf.mxu0
        %v430 = vadd.f32 %v328, %v429
        %431 = vmatmul.f32.gmra.mxu0 %v351
        %v432 = vpop.f32.mrf.mxu0
        %v433 = vadd.f32 %v328, %v432
        %434 = vmatmul.f32.gmra.mxu0 %v354
        %v435 = vpop.f32.mrf.mxu0
        %v436 = vadd.f32 %v328, %v435
        %437 = vdwg.mxu0
        %v438 = vmax.f32 %v415, 0.0
        %v439 = vmax.f32 %v418, 0.0
        %v440 = vmax.f32 %v421, 0.0
        %v441 = vmax.f32 %v424, 0.0
        %v442 = vmax.f32 %v427, 0.0
        %v443 = vmax.f32 %v430, 0.0
        %v444 = vmax.f32 %v433, 0.0
        %v445 = vmax.f32 %v436, 0.0
        %vm446 = vcmask 130048
        %v447 = vsel %vm446, %v438, 0.0
        %v448 = vsel %vm446, %v439, 0.0
        %v449 = vadd.f32 %v447, %v448
        %v450 = vsel %vm446, %v440, 0.0
        %v451 = vadd.f32 %v449, %v450
        %v452 = vsel %vm446, %v441, 0.0
        %v453 = vadd.f32 %v451, %v452
        %v454 = vsel %vm446, %v442, 0.0
        %v455 = vadd.f32 %v453, %v454
        %v456 = vsel %vm446, %v443, 0.0
        %v457 = vadd.f32 %v455, %v456
        %v458 = vsel %vm446, %v444, 0.0
        %v459 = vadd.f32 %v457, %v458
        %v460 = vsel %vm446, %v445, 0.0
        %v461 = vadd.f32 %v459, %v460
        %v462 = vrot.slane %v461, 4
        %v463 = vadd.f32 %v461, %v462
        %v464 = vrot.slane %v463, 2
        %v465 = vadd.f32 %v463, %v464
        %v466 = vrot.slane %v465, 1
        %v467 = vadd.f32 %v465, %v466
        %v468 = vrcp.pop 64.0
        %v469 = vmul.f32 64.0, %v468
        %v470 = vsub.f32 1.0, %v469
        %v471 = vmul.f32 %v468, %v470
        %v472 = vadd.f32 %v468, %v471
        %vm473 = vweird.f32 %v468
        %v474 = vsel %vm473, %v468, %v472
        %v475 = vmul.f32 %v467, %v474
        %v476 = vld [vmem:[%s3] sm:$0x1]
        %v477 = vmul.f32 %v476, %v475
        %vm478 = vcmask 122880
        %v479 = vsel %vm478, %v477, 0.0
        %480 = vadd.xlane.f32.xlu0 %v479
        %v481 = vpop.xlane.xlu0 %480
        %v482 = vld [vmem:[#allocation2] sm:$0x1]
        %v483 = vadd.f32 %v481, %v482
        %v484 = vmax.f32 %v483, 0.0
        %v485 = vld [vmem:[%s5] sm:$0x1]
        %487 = vset.pattern.permute.xlu0 0
        %488 = vperm.xlu0 %487, %v484
        %v489 = vpop.permute.xlu0 %488
        %v491 = vmul.f32 %v485, %v489
        %v492 = vadd.f32 %v491, 0.0
        %v493 = vld [vmem:[%s6] sm:$0x1]
        %v494 = vadd.f32 %v492, %v493
        %v495 = vsub.f32 0.0, %v494
        %v496 = vmul.f32 %v495, 1.442695
        %v497 = vpow.pop %v496
        %v498 = vadd.f32 %v497, 1.0
        %v499 = vrcp.pop %v498
        %v500 = vmul.f32 %v498, %v499
        %v501 = vsub.f32 1.0, %v500
        %v502 = vmul.f32 %v499, %v501
        %v503 = vadd.f32 %v499, %v502
        %vm504 = vweird.f32 %v498
        %vm505 = vweird.f32 %v499
        %vm506 = vmor %vm504, %vm505
        %v507 = vsel %vm506, %v499, %v503
        %v508 = vand.u32 2147483647, %v498
        %vm509 = vcmp.eq.f32.partialorder %v508, 8.507059e+37
        %v510 = vand.u32 %v498, 2147483648
        %v511 = vor.u32 1.1754944e-38, %v510
        %v512 = vsel %vm509, %v511, %v507
        %v514 = vperm.slane %v512, 0
        %v516 = vmul.f32 %v438, %v514
        %v517 = vmul.f32 %v439, %v514
        %v518 = vmul.f32 %v440, %v514
        %v519 = vmul.f32 %v441, %v514
        %v520 = vmul.f32 %v442, %v514
        %v521 = vmul.f32 %v443, %v514
        %v522 = vmul.f32 %v444, %v514
        %v523 = vmul.f32 %v445, %v514
        %v524 = vld [vmem:[%s7] sm:$0xff]
        %v525 = vld [vmem:[%s7 + $0x8] sm:$0xff]
        %v527 = vsel %vm446, %v516, 0
        %v530 = vsel %vm446, %v517, 0
        %v533 = vsel %vm446, %v518, 0
        %v536 = vsel %vm446, %v519, 0
        %v539 = vsel %vm446, %v520, 0
        %v542 = vsel %vm446, %v521, 0
        %v545 = vsel %vm446, %v522, 0
        %v548 = vsel %vm446, %v523, 0
        %550 = vmatpush.msra.mxu0 0.0
        %551 = vmatpush.msra.mxu0 0.0
        %552 = vmatpush.msra.mxu0 0.0
        %553 = vmatpush.msra.mxu0 0.0
        %554 = vmatpush.msra.mxu0 0.0
        %555 = vmatpush.msra.mxu0 0.0
        %556 = vmatpush.msra.mxu0 0.0
        %557 = vmatpush.msra.mxu0 0.0
        %558 = vmatpush.msra.mxu0 0.0
        %559 = vmatpush.msra.mxu0 0.0
        %560 = vmatpush.msra.mxu0 0.0
        %561 = vmatpush.msra.mxu0 0.0
        %562 = vmatpush.msra.mxu0 0.0
        %563 = vmatpush.msra.mxu0 0.0
        %564 = vmatpush.msra.mxu0 %v525
        %565 = vmatpush.msra.mxu0 %v524
        %566 = vmatmul.f32.gmra.mxu0 %v527
        %v567 = vpop.f32.mrf.mxu0
        %v568 = vadd.f32 %v374, %v567
        %569 = vmatmul.f32.gmra.mxu0 %v530
        %v570 = vpop.f32.mrf.mxu0
        %v571 = vadd.f32 %v377, %v570
        %572 = vmatmul.f32.gmra.mxu0 %v533
        %v573 = vpop.f32.mrf.mxu0
        %v574 = vadd.f32 %v380, %v573
        %575 = vmatmul.f32.gmra.mxu0 %v536
        %v576 = vpop.f32.mrf.mxu0
        %v577 = vadd.f32 %v383, %v576
        %578 = vmatmul.f32.gmra.mxu0 %v539
        %v579 = vpop.f32.mrf.mxu0
        %v580 = vadd.f32 %v386, %v579
        %581 = vmatmul.f32.gmra.mxu0 %v542
        %v582 = vpop.f32.mrf.mxu0
        %v583 = vadd.f32 %v389, %v582
        %584 = vmatmul.f32.gmra.mxu0 %v545
        %v585 = vpop.f32.mrf.mxu0
        %v586 = vadd.f32 %v392, %v585
        %587 = vmatmul.f32.gmra.mxu0 %v548
        %v588 = vpop.f32.mrf.mxu0
        %v589 = vadd.f32 %v395, %v588
        %590 = vdwg.mxu0
        %v591 = vmax.f32 %v568, 0.0
        %v592 = vmax.f32 %v571, 0.0
        %v593 = vmax.f32 %v574, 0.0
        %v594 = vmax.f32 %v577, 0.0
        %v595 = vmax.f32 %v580, 0.0
        %v596 = vmax.f32 %v583, 0.0
        %v597 = vmax.f32 %v586, 0.0
        %v598 = vmax.f32 %v589, 0.0
        %599 = vst [vmem:[%s301] sm:$0xff] %v591
        %600 = vst [vmem:[%s301 + $0x8] sm:$0xff] %v592
        %601 = vst [vmem:[%s301 + $0x10] sm:$0xff] %v593
        %602 = vst [vmem:[%s301 + $0x18] sm:$0xff] %v594
        %603 = vst [vmem:[%s301 + $0x20] sm:$0xff] %v595
        %604 = vst [vmem:[%s301 + $0x28] sm:$0xff] %v596
        %605 = vst [vmem:[%s301 + $0x30] sm:$0xff] %v597
        %606 = vst [vmem:[%s301 + $0x38] sm:$0xff] %v598
        %s607 = sand.u32 %s205, 1
        %s608 = scalar_lea.sflag [#allocation4], %s607
        %s609 = sand.u32 %s205, 1
        %s610 = smul.addr %s609, 64
        %s611 = scalar_lea.vmem [#allocation3], %s610
        // Predicated region
        $region53: #{tpu_custom_call.1} parent=51 // pred_check
          %p612 = pneg %p215
        $region54: #{tpu_custom_call.1} parent=51 // pred_check_branch
          %614 = sbr.rel (%p612) target = $region56
        $region55: #{tpu_custom_call.1} parent=51 // pred_region
          %s615 = smul.u32 8, %s24
          %617 = vsyncadd %s608, 0
          %s618 = smul.addr %s615, 8
          %s619 = scalar_lea.hbm %s8, %s618
          %s620 = sshll.u32 %s611, 4
          %s621 = int_to_ptr.vmem [resolvable:$true] %s620
          %s622 = sshll.u32 %s619, 4
          %s623 = int_to_ptr.hbm [resolvable:$true] %s622
          %628 = dma.vmem_to_hbm [thread:$0]  %s621, 1024, %s623, %s608, 128, 128, 8
        $region56: #{tpu_custom_call.1} parent=51 // pred_fallthru
          _
      $region52: #{tpu_custom_call.1} parent=5 // pred_fallthru
        _
      %p629 = scmp.le.s32.totalorder 2, %s19
      // Predicated region
      $region57: #{tpu_custom_call.1} parent=5 // pred_check
        %p630 = pneg %p629
      $region58: #{tpu_custom_call.1} parent=5 // pred_check_branch
        %632 = sbr.rel (%p630) target = $region60
      $region59: #{tpu_custom_call.1} parent=5 // pred_region
        %s633 = ssub.s32 %s19, 2
        // Predicated region
        $region61: #{tpu_custom_call.1} parent=59 // pred_check
          %p634 = pneg %p221
        $region62: #{tpu_custom_call.1} parent=59 // pred_check_branch
          %636 = sbr.rel (%p634) target = $region64
        $region63: #{tpu_custom_call.1} parent=59 // pred_region
          %s637 = sand.u32 %s206, 1
          %s638 = scalar_lea.sflag [#allocation4], %s637
          %s639 = sand.u32 %s206, 1
          %s640 = smul.addr %s639, 64
          %s641 = scalar_lea.vmem [#allocation3], %s640
          %643 = dma.done %s638, 1024
        $region64: #{tpu_custom_call.1} parent=59 // pred_fallthru
          _
      $region60: #{tpu_custom_call.1} parent=5 // pred_fallthru
        _
    $region6: #{tpu_custom_call.1} parent=1 // loop_footer
      %s23 = sadd.s32 1, %s19
    $region7: #{tpu_custom_call.1} parent=1 // loop_footer_branch
      %18 = sbr.rel target = $region3
    $region8: #{tpu_custom_call.1} parent=1 // loop_exit
      _
    %644 = vsyncpa [#allocation4], 1
    %s645 = scalar_lea.sflag [#allocation4], 1
    %646 = vsyncpa %s645, 1

</llo_original>
